<compile_context>
chip_gen: v7x
topology: tpu7x:2x2x1
jax: 0.10.0
libtpu: 0.0.40
codegen_flags: <defaults>
</compile_context>

<pallas_src>
import functools

import jax
import jax.numpy as jnp
from jax.experimental import pallas as pl
from jax.experimental.pallas import tpu as pltpu

_LANES = 128
_SUBLANES = 8
_NCORES = 2  # leading core-split ("parallel") grid axis; harmless on 1-TC chips


def _round_up(v: int, m: int) -> int:
    return -(-v // m) * m


def _auc_kernel(dx_ref, ys_ref, out_ref):
    """Accumulate lane-parallel partials of sum(dx*ysum), min(dx), max(dx).

    out_ref block: (1, 3, 8, 128) f32, resident across the inner ("arbitrary")
    grid axis.  [0]=per-lane partial sums, [1]=per-lane dx min, [2]=per-lane
    dx max.  Cross-lane/cross-core reduce + direction/area live in the wrapper.
    """
    i = pl.program_id(1)

    @pl.when(i == 0)
    def _init():
        out_ref[0, 0] = jnp.zeros((_SUBLANES, _LANES), jnp.float32)
        out_ref[0, 1] = jnp.full((_SUBLANES, _LANES), jnp.inf, jnp.float32)
        out_ref[0, 2] = jnp.full((_SUBLANES, _LANES), -jnp.inf, jnp.float32)

    dx = dx_ref[...]                                    # (block_rows, 128)
    prod = dx * ys_ref[...]
    r = dx.shape[0] // _SUBLANES
    dx3 = dx.reshape(r, _SUBLANES, _LANES)              # layout-free regroup
    prod3 = prod.reshape(r, _SUBLANES, _LANES)
    out_ref[0, 0] += jnp.sum(prod3, axis=0)             # VPU-only reductions
    out_ref[0, 1] = jnp.minimum(out_ref[0, 1], jnp.min(dx3, axis=0))
    out_ref[0, 2] = jnp.maximum(out_ref[0, 2], jnp.max(dx3, axis=0))


def _ref_auc(t, f):
    """Pure-JAX reference / small-n fast path (NaN instead of sklearn's
    ValueError for non-monotonic fpr)."""
    dx = f[1:] - f[:-1]
    area = jnp.sum(dx * (t[1:] + t[:-1]) * 0.5)
    direction = jnp.where(
        jnp.min(dx) >= 0.0, 1.0, jnp.where(jnp.max(dx) <= 0.0, -1.0, jnp.nan)
    )
    return direction * area


@functools.partial(jax.jit, static_argnames=("max_block_rows", "pallas_min_n"))
def _bi_cls_auc_impl(tpr, fpr, max_block_rows, pallas_min_n):
    assert tpr.shape == fpr.shape and tpr.ndim == 1
    n = int(fpr.shape[0])
    if n < 2:
        # TODO(synk): sklearn.metrics.auc raises ValueError for n < 2; no
        #             exceptions from a jitted/TPU path, so return 0.0.
        return jnp.zeros((), jnp.float32)

    t = tpr.astype(jnp.float32)
    f = fpr.astype(jnp.float32)

    if n <= pallas_min_n:
        # Small-n fast path: a single fused XLA reduction beats padding,
        # repacking and pallas_call dispatch by orders of magnitude.
        return _ref_auc(t, f)

    m = n - 1                                  # number of trapezoid segments
    dx = f[1:] - f[:-1]
    ys = t[1:] + t[:-1]

    # ---- choose (core-split, inner, block_rows) tiling ----------------------
    rows_needed = -(-m // _LANES)
    rows_per_core = max(_SUBLANES,
                        _round_up(-(-rows_needed // _NCORES), _SUBLANES))
    block_cap = max(_SUBLANES, (max_block_rows // _SUBLANES) * _SUBLANES)
    inner = -(-rows_per_core // block_cap)
    block_rows = _round_up(-(-rows_per_core // inner), _SUBLANES)
    rows_per_core = inner * block_rows
    total_rows = _NCORES * rows_per_core
    total_elems = total_rows * _LANES

    # Zero-pad (padded dx == 0 is neutral for area and the non-strict
    # monotonicity test) and repack into dense (rows, 128) f32 tiles.
    pad = total_elems - m
    dx2 = jnp.pad(dx, (0, pad)).reshape(total_rows, _LANES)
    ys2 = jnp.pad(ys, (0, pad)).reshape(total_rows, _LANES)

    block_bytes = block_rows * _LANES * 4
    # 2 streams x 2 pipeline buffers + in-kernel temporaries + margin; set
    # explicitly so v5e's 16 MiB default scoped-VMEM limit never binds.
    vmem_limit = 8 * block_bytes + (8 << 20)

    in_spec = pl.BlockSpec((block_rows, _LANES), lambda c, i: (c * inner + i, 0))
    parts = pl.pallas_call(
        _auc_kernel,
        out_shape=jax.ShapeDtypeStruct((_NCORES, 3, _SUBLANES, _LANES),
                                       jnp.float32),
        grid=(_NCORES, inner),
        in_specs=[in_spec, in_spec],
        out_specs=pl.BlockSpec((1, 3, _SUBLANES, _LANES),
                               lambda c, i: (c, 0, 0, 0)),
        compiler_params=pltpu.CompilerParams(
            dimension_semantics=("parallel", "arbitrary"),
            vmem_limit_bytes=vmem_limit,
        ),
    )(dx2, ys2)

    # Tiny cross-lane / cross-core combine (2*3*8*128 floats) in plain XLA.
    total = jnp.sum(parts[:, 0])
    dmin = jnp.min(parts[:, 1])
    dmax = jnp.max(parts[:, 2])
    area = 0.5 * total
    # TODO(synk): sklearn raises ValueError for non-monotonic fpr; emit NaN.
    direction = jnp.where(dmin >= 0.0, 1.0,
                          jnp.where(dmax <= 0.0, -1.0, jnp.nan))
    return direction * area


def bi_cls_auc(tpr: jax.Array, fpr: jax.Array, *,
               max_block_rows: int = 4096, pallas_min_n=None) -> jax.Array:
    """JAX/Pallas equivalent of BiClsAuc().forward(tpr, fpr)."""
    if pallas_min_n is None:
        pallas_min_n = max_block_rows * _LANES   # ~ one block's worth of elems
    return _bi_cls_auc_impl(tpr, fpr,
                            max_block_rows=int(max_block_rows),
                            pallas_min_n=int(pallas_min_n))


if __name__ == "__main__":
    key = jax.random.PRNGKey(0)
    k1, k2, k3, k4 = jax.random.split(key, 4)

    # Small monotone ROC curve, forced through the Pallas path.
    n = 8
    fpr = jnp.sort(jax.random.uniform(k1, (n,), dtype=jnp.float32))
    tpr = jnp.sort(jax.random.uniform(k2, (n,), dtype=jnp.float32))
    fpr = fpr.at[0].set(0.0).at[-1].set(1.0)
    tpr = tpr.at[0].set(0.0).at[-1].set(1.0)

    got = bi_cls_auc(tpr, fpr, max_block_rows=8, pallas_min_n=0)
    jax.block_until_ready(got)
    exp = _ref_auc(tpr, fpr)
    assert jnp.allclose(got, exp, atol=1e-6), (got, exp)

    # Decreasing-fpr curve: direction flips to -1, |AUC| unchanged.
    got_dec = bi_cls_auc(tpr[::-1], fpr[::-1], max_block_rows=8, pallas_min_n=0)
    jax.block_until_ready(got_dec)
    exp_dec = _ref_auc(tpr[::-1], fpr[::-1])
    assert jnp.allclose(got_dec, exp_dec, atol=1e-6), (got_dec, exp_dec)

    # Larger curve with small blocks -> multi-step inner ("arbitrary") axis and
    # both core-split accumulators exercised.
    m = 16384
    fpr_l = jnp.sort(jax.random.uniform(k3, (m,), dtype=jnp.float32))
    tpr_l = jnp.sort(jax.random.uniform(k4, (m,), dtype=jnp.float32))
    got_l = bi_cls_auc(tpr_l, fpr_l, max_block_rows=16, pallas_min_n=0)
    jax.block_until_ready(got_l)
    exp_l = _ref_auc(tpr_l, fpr_l)
    assert jnp.allclose(got_l, exp_l, rtol=1e-4, atol=1e-5), (got_l, exp_l)

    # Default parameters take the small-n pure-JAX fast path; must agree.
    got_fast = bi_cls_auc(tpr_l, fpr_l)
    jax.block_until_ready(got_fast)
    assert jnp.allclose(got_fast, exp_l, rtol=1e-4, atol=1e-5), (got_fast, exp_l)

    print("KERNEL_OK")
</pallas_src>

<mosaic_0001>
module attributes {stable_mosaic.version = 11 : i64} {
  func.func @_auc_kernel(%arg0: i32, %arg1: i32, %arg2: memref<8x128xf32, #tpu.memory_space<vmem>>, %arg3: memref<8x128xf32, #tpu.memory_space<vmem>>, %arg4: memref<1x3x8x128xf32, #tpu.memory_space<vmem>>) attributes {dimension_semantics = [#tpu.dimension_semantics<parallel>, #tpu.dimension_semantics<arbitrary>], iteration_bounds = array<i64: 2, 1>, scalar_prefetch = 0 : i64, scratch_operands = 0 : i64, tpu.core_type = #tpu.core_type<tc>, window_params = [{transform_indices = @transform_0, window_bounds = array<i64: 8, 128>}, {transform_indices = @transform_1, window_bounds = array<i64: 8, 128>}, {transform_indices = @transform_2, window_bounds = array<i64: 1, 3, 8, 128>}]} {
    %c0_i32 = arith.constant 0 : i32
    %0 = arith.cmpi eq, %arg1, %c0_i32 : i32
    %1 = arith.extui %0 : i1 to i32
    %c0_i32_0 = arith.constant 0 : i32
    %2 = arith.cmpi ne, %1, %c0_i32_0 : i32
    scf.if %2 {
      %cst_28 = arith.constant 0.000000e+00 : f32
      %29 = vector.broadcast %cst_28 : f32 to vector<8x128xf32>
      %c0_29 = arith.constant 0 : index
      %c0_30 = arith.constant 0 : index
      %c0_31 = arith.constant 0 : index
      %c0_32 = arith.constant 0 : index
      %30 = vector.load %arg4[%c0_29, %c0_30, %c0_31, %c0_32] : memref<1x3x8x128xf32, #tpu.memory_space<vmem>>, vector<1x1x8x128xf32>
      %31 = vector.shape_cast %30 : vector<1x1x8x128xf32> to vector<8x128xf32>
      %32 = vector.shape_cast %29 : vector<8x128xf32> to vector<1x1x8x128xf32>
      tpu.vector_store %arg4[%c0_29, %c0_30, %c0_31, %c0_32], %32 {strides = array<i32>} : memref<1x3x8x128xf32, #tpu.memory_space<vmem>>, vector<1x1x8x128xf32>,
      %cst_33 = arith.constant 0x7F800000 : f32
      %33 = vector.broadcast %cst_33 : f32 to vector<8x128xf32>
      %c0_34 = arith.constant 0 : index
      %c1_35 = arith.constant 1 : index
      %c0_36 = arith.constant 0 : index
      %c0_37 = arith.constant 0 : index
      %34 = vector.load %arg4[%c0_34, %c1_35, %c0_36, %c0_37] : memref<1x3x8x128xf32, #tpu.memory_space<vmem>>, vector<1x1x8x128xf32>
      %35 = vector.shape_cast %34 : vector<1x1x8x128xf32> to vector<8x128xf32>
      %36 = vector.shape_cast %33 : vector<8x128xf32> to vector<1x1x8x128xf32>
      tpu.vector_store %arg4[%c0_34, %c1_35, %c0_36, %c0_37], %36 {strides = array<i32>} : memref<1x3x8x128xf32, #tpu.memory_space<vmem>>, vector<1x1x8x128xf32>,
      %cst_38 = arith.constant 0xFF800000 : f32
      %37 = vector.broadcast %cst_38 : f32 to vector<8x128xf32>
      %c0_39 = arith.constant 0 : index
      %c2_40 = arith.constant 2 : index
      %c0_41 = arith.constant 0 : index
      %c0_42 = arith.constant 0 : index
      %38 = vector.load %arg4[%c0_39, %c2_40, %c0_41, %c0_42] : memref<1x3x8x128xf32, #tpu.memory_space<vmem>>, vector<1x1x8x128xf32>
      %39 = vector.shape_cast %38 : vector<1x1x8x128xf32> to vector<8x128xf32>
      %40 = vector.shape_cast %37 : vector<8x128xf32> to vector<1x1x8x128xf32>
      tpu.vector_store %arg4[%c0_39, %c2_40, %c0_41, %c0_42], %40 {strides = array<i32>} : memref<1x3x8x128xf32, #tpu.memory_space<vmem>>, vector<1x1x8x128xf32>,
    } else {
    }
    %c0 = arith.constant 0 : index
    %c0_1 = arith.constant 0 : index
    %3 = vector.load %arg2[%c0, %c0_1] : memref<8x128xf32, #tpu.memory_space<vmem>>, vector<8x128xf32>
    %c0_2 = arith.constant 0 : index
    %c0_3 = arith.constant 0 : index
    %4 = vector.load %arg3[%c0_2, %c0_3] : memref<8x128xf32, #tpu.memory_space<vmem>>, vector<8x128xf32>
    %5 = arith.mulf %3, %4 : vector<8x128xf32>
    %6 = vector.shape_cast %3 : vector<8x128xf32> to vector<1x8x128xf32>
    %7 = vector.shape_cast %5 : vector<8x128xf32> to vector<1x8x128xf32>
    %c0_4 = arith.constant 0 : index
    %c0_5 = arith.constant 0 : index
    %c0_6 = arith.constant 0 : index
    %c0_7 = arith.constant 0 : index
    %8 = vector.load %arg4[%c0_4, %c0_5, %c0_6, %c0_7] : memref<1x3x8x128xf32, #tpu.memory_space<vmem>>, vector<1x1x8x128xf32>
    %9 = vector.shape_cast %8 : vector<1x1x8x128xf32> to vector<8x128xf32>
    %cst = arith.constant dense<0.000000e+00> : vector<8x128xf32>
    %10 = vector.multi_reduction <add>, %7, %cst [0] : vector<1x8x128xf32> to vector<8x128xf32>
    %11 = arith.addf %9, %10 : vector<8x128xf32>
    %c0_8 = arith.constant 0 : index
    %c0_9 = arith.constant 0 : index
    %c0_10 = arith.constant 0 : index
    %c0_11 = arith.constant 0 : index
    %12 = vector.load %arg4[%c0_8, %c0_9, %c0_10, %c0_11] : memref<1x3x8x128xf32, #tpu.memory_space<vmem>>, vector<1x1x8x128xf32>
    %13 = vector.shape_cast %12 : vector<1x1x8x128xf32> to vector<8x128xf32>
    %14 = vector.shape_cast %11 : vector<8x128xf32> to vector<1x1x8x128xf32>
    tpu.vector_store %arg4[%c0_8, %c0_9, %c0_10, %c0_11], %14 {strides = array<i32>} : memref<1x3x8x128xf32, #tpu.memory_space<vmem>>, vector<1x1x8x128xf32>,
    %c0_12 = arith.constant 0 : index
    %c1 = arith.constant 1 : index
    %c0_13 = arith.constant 0 : index
    %c0_14 = arith.constant 0 : index
    %15 = vector.load %arg4[%c0_12, %c1, %c0_13, %c0_14] : memref<1x3x8x128xf32, #tpu.memory_space<vmem>>, vector<1x1x8x128xf32>
    %16 = vector.shape_cast %15 : vector<1x1x8x128xf32> to vector<8x128xf32>
    %cst_15 = arith.constant dense<0x7F800000> : vector<8x128xf32>
    %17 = vector.multi_reduction <minimumf>, %6, %cst_15 [0] : vector<1x8x128xf32> to vector<8x128xf32>
    %18 = arith.minimumf %16, %17 : vector<8x128xf32>
    %c0_16 = arith.constant 0 : index
    %c1_17 = arith.constant 1 : index
    %c0_18 = arith.constant 0 : index
    %c0_19 = arith.constant 0 : index
    %19 = vector.load %arg4[%c0_16, %c1_17, %c0_18, %c0_19] : memref<1x3x8x128xf32, #tpu.memory_space<vmem>>, vector<1x1x8x128xf32>
    %20 = vector.shape_cast %19 : vector<1x1x8x128xf32> to vector<8x128xf32>
    %21 = vector.shape_cast %18 : vector<8x128xf32> to vector<1x1x8x128xf32>
    tpu.vector_store %arg4[%c0_16, %c1_17, %c0_18, %c0_19], %21 {strides = array<i32>} : memref<1x3x8x128xf32, #tpu.memory_space<vmem>>, vector<1x1x8x128xf32>,
    %c0_20 = arith.constant 0 : index
    %c2 = arith.constant 2 : index
    %c0_21 = arith.constant 0 : index
    %c0_22 = arith.constant 0 : index
    %22 = vector.load %arg4[%c0_20, %c2, %c0_21, %c0_22] : memref<1x3x8x128xf32, #tpu.memory_space<vmem>>, vector<1x1x8x128xf32>
    %23 = vector.shape_cast %22 : vector<1x1x8x128xf32> to vector<8x128xf32>
    %cst_23 = arith.constant dense<0xFF800000> : vector<8x128xf32>
    %24 = vector.multi_reduction <maximumf>, %6, %cst_23 [0] : vector<1x8x128xf32> to vector<8x128xf32>
    %25 = arith.maximumf %23, %24 : vector<8x128xf32>
    %c0_24 = arith.constant 0 : index
    %c2_25 = arith.constant 2 : index
    %c0_26 = arith.constant 0 : index
    %c0_27 = arith.constant 0 : index
    %26 = vector.load %arg4[%c0_24, %c2_25, %c0_26, %c0_27] : memref<1x3x8x128xf32, #tpu.memory_space<vmem>>, vector<1x1x8x128xf32>
    %27 = vector.shape_cast %26 : vector<1x1x8x128xf32> to vector<8x128xf32>
    %28 = vector.shape_cast %25 : vector<8x128xf32> to vector<1x1x8x128xf32>
    tpu.vector_store %arg4[%c0_24, %c2_25, %c0_26, %c0_27], %28 {strides = array<i32>} : memref<1x3x8x128xf32, #tpu.memory_space<vmem>>, vector<1x1x8x128xf32>,
    return
  }
  func.func @transform_0(%arg0: i32, %arg1: i32) -> (i32, i32) {
    %c1_i32 = arith.constant 1 : i32
    %0 = arith.muli %arg0, %c1_i32 : i32
    %1 = arith.addi %0, %arg1 : i32
    %c0_i32 = arith.constant 0 : i32
    %c0_i32_0 = arith.constant 0 : i32
    return %1, %c0_i32 : i32, i32
  }
  func.func @transform_1(%arg0: i32, %arg1: i32) -> (i32, i32) {
    %c1_i32 = arith.constant 1 : i32
    %0 = arith.muli %arg0, %c1_i32 : i32
    %1 = arith.addi %0, %arg1 : i32
    %c0_i32 = arith.constant 0 : i32
    %c0_i32_0 = arith.constant 0 : i32
    return %1, %c0_i32 : i32, i32
  }
  func.func @transform_2(%arg0: i32, %arg1: i32) -> (i32, i32, i32, i32) {
    %c0_i32 = arith.constant 0 : i32
    %c0_i32_0 = arith.constant 0 : i32
    %c0_i32_1 = arith.constant 0 : i32
    %c0_i32_2 = arith.constant 0 : i32
    return %arg0, %c0_i32, %c0_i32_0, %c0_i32_1 : i32, i32, i32, i32
  }
}

</mosaic_0001>

<llo_original>
// kernel: _bi_cls_auc_impl.1
$region0: #{_bi_cls_auc_impl.1}
  #allocation0 [shape = 'u32[]', space=smem, size = 0x4, offset = 0x4, fixed_abs, tag = 'smem constant byte address 0x4 - core index']
  #allocation1 [shape = 'u32[144,128]{1,0:T(1,128)}', space=vmem, size = 0x12000, scoped, tag = 'internal scratch']
  %s0 = inlined_call_operand.vmem [shape: f32[16,128], index: 0, kind: input, shape index: {}]
  %s1 = inlined_call_operand.vmem [shape: f32[16,128], index: 1, kind: input, shape index: {}]
  %s2 = inlined_call_operand.vmem [shape: f32[2,3,8,128], index: 2, kind: output, shape index: {}]
  %s3 = sld [smem:[#allocation0]]
  $region45: #{_bi_cls_auc_impl.1} parent=0
    _
  %s5 = ssub.s32 1, %s3
  %s6 = scalar_select 0, %s5, %s3
  loop: start=0, step=1, limit=4
  $region2: #{_bi_cls_auc_impl.1} parent=0 // loop_pre_header
    _
  $region3: #{_bi_cls_auc_impl.1} parent=0 // loop_header
    %s8 = sphi 0, %s12
    %p9 = scmp.ge.s32.totalorder %s8, 4
    %s15 = sphi 0, %s27
    %s16 = sphi 0, %s23
    %s17 = sphi 0, %s15
    %s18 = sphi 0, %s16
    %s19 = sphi 0, %s17
    %s20 = sphi 0, %s18
    %s32 = sphi 0, %s34
    %s35 = sphi 0, %s32
    %s36 = sphi 0, %s35
    %s52 = sphi 0, %s36
    %s60 = sphi 0, %s62
    %s63 = sphi 0, %s60
    %s64 = sphi 0, %s63
    %s80 = sphi 0, %s64
    %s86 = sphi 0, %s88
    %s89 = sphi 0, %s86
    %s90 = sphi 0, %s89
    %s106 = sphi 0, %s90
  $region4: #{_bi_cls_auc_impl.1} parent=0 // loop_header_branch
    %11 = sbr.rel (%p9) target = $region8
  $region5: #{_bi_cls_auc_impl.1} parent=0 // loop_body
    %s13 = ssub.s32 %s8, 1
    %s14 = ssub.s32 %s8, 2
    %s21 = sadd.s32 1, %s16
    %p22 = scmp.ge.s32.totalorder %s21, 1
    %s23 = scalar_select %p22, 0, %s21
    %s24 = sadd.s32 1, %s15
    %s25 = scalar_select %p22, %s24, %s15
    %p26 = scmp.ge.s32.totalorder %s25, 2
    %s27 = scalar_select %p26, 0, %s25
    %s28 = sadd.s32 %s15, %s16
    %s29 = sadd.s32 %s27, %s23
    %s30 = ssub.s32 %s28, %s29
    %p31 = scmp.eq.s32.totalorder %s30, 0
    %s33 = sadd.s32 %s32, 1
    %s34 = scalar_select %p31, %s32, %s33
    %p37 = pneg %p31
    %p38 = scmp.eq.s32.totalorder %s8, 1
    %p39 = por %p37, %p38
    %p40 = scmp.ne.s32.totalorder %s32, %s35
    %p41 = scmp.eq.s32.totalorder %s8, 0
    %p42 = por %p40, %p41
    %p43 = scmp.ne.s32.totalorder %s32, %s35
    %p44 = scmp.eq.s32.totalorder %s13, 1
    %p45 = por %p43, %p44
    %p46 = scmp.ne.s32.totalorder %s35, %s36
    %p47 = scmp.eq.s32.totalorder %s13, 0
    %p48 = por %p46, %p47
    %p49 = scmp.ne.s32.totalorder %s35, %s36
    %p50 = scmp.eq.s32.totalorder %s14, 1
    %p51 = por %p49, %p50
    %p53 = scmp.ne.s32.totalorder %s36, %s52
    %p54 = scmp.eq.s32.totalorder %s14, 0
    %p55 = por %p53, %p54
    %s56 = sadd.s32 %s15, %s16
    %s57 = sadd.s32 %s27, %s23
    %s58 = ssub.s32 %s56, %s57
    %p59 = scmp.eq.s32.totalorder %s58, 0
    %s61 = sadd.s32 %s60, 1
    %s62 = scalar_select %p59, %s60, %s61
    %p65 = pneg %p59
    %p66 = scmp.eq.s32.totalorder %s8, 1
    %p67 = por %p65, %p66
    %p68 = scmp.ne.s32.totalorder %s60, %s63
    %p69 = scmp.eq.s32.totalorder %s8, 0
    %p70 = por %p68, %p69
    %p71 = scmp.ne.s32.totalorder %s60, %s63
    %p72 = scmp.eq.s32.totalorder %s13, 1
    %p73 = por %p71, %p72
    %p74 = scmp.ne.s32.totalorder %s63, %s64
    %p75 = scmp.eq.s32.totalorder %s13, 0
    %p76 = por %p74, %p75
    %p77 = scmp.ne.s32.totalorder %s63, %s64
    %p78 = scmp.eq.s32.totalorder %s14, 1
    %p79 = por %p77, %p78
    %p81 = scmp.ne.s32.totalorder %s64, %s80
    %p82 = scmp.eq.s32.totalorder %s14, 0
    %p83 = por %p81, %p82
    %s84 = ssub.s32 %s15, %s27
    %p85 = scmp.eq.s32.totalorder %s84, 0
    %s87 = sadd.s32 %s86, 1
    %s88 = scalar_select %p85, %s86, %s87
    %p91 = pneg %p85
    %p92 = scmp.eq.s32.totalorder %s8, 1
    %p93 = por %p91, %p92
    %p94 = scmp.ne.s32.totalorder %s86, %s89
    %p95 = scmp.eq.s32.totalorder %s8, 0
    %p96 = por %p94, %p95
    %p97 = scmp.ne.s32.totalorder %s86, %s89
    %p98 = scmp.eq.s32.totalorder %s13, 1
    %p99 = por %p97, %p98
    %p100 = scmp.ne.s32.totalorder %s89, %s90
    %p101 = scmp.eq.s32.totalorder %s13, 0
    %p102 = por %p100, %p101
    %p103 = scmp.ne.s32.totalorder %s89, %s90
    %p104 = scmp.eq.s32.totalorder %s14, 1
    %p105 = por %p103, %p104
    %p107 = scmp.ne.s32.totalorder %s90, %s106
    %p108 = scmp.eq.s32.totalorder %s14, 0
    %p109 = por %p107, %p108
    %p110 = scmp.le.s32.totalorder 1, %s8
    %p111 = scmp.lt.s32.totalorder %s8, 3
    %p112 = pnand %p110, %p111
    %p113 = pneg %p112
    // Predicated region
    $region9: #{_bi_cls_auc_impl.1} parent=5 // pred_check
      _
    $region10: #{_bi_cls_auc_impl.1} parent=5 // pred_check_branch
      %115 = sbr.rel (%p112) target = $region12
    $region11: #{_bi_cls_auc_impl.1} parent=5 // pred_region
      %s116 = ssub.s32 %s8, 1
    $region12: #{_bi_cls_auc_impl.1} parent=5 // pred_fallthru
      _
    %p117 = scmp.lt.s32.totalorder %s8, 2
    // Predicated region
    $region13: #{_bi_cls_auc_impl.1} parent=5 // pred_check
      %p118 = pneg %p117
    $region14: #{_bi_cls_auc_impl.1} parent=5 // pred_check_branch
      %120 = sbr.rel (%p118) target = $region16
    $region15: #{_bi_cls_auc_impl.1} parent=5 // pred_region
      // Predicated region
      $region17: #{_bi_cls_auc_impl.1} parent=15 // pred_check
        %p121 = pneg %p42
      $region18: #{_bi_cls_auc_impl.1} parent=15 // pred_check_branch
        %123 = sbr.rel (%p121) target = $region20
      $region19: #{_bi_cls_auc_impl.1} parent=15 // pred_region
        %s124 = sadd.s32 %s15, %s16
        %p125 = scmp.lt.s32.totalorder %s124, 1
        %s126 = scalar_select %p125, %s124, 1
        %s127 = smul.addr %s126, 8
        %s128 = scalar_lea.vmem %s0, %s127
        %s129 = sadd.s32 %s15, %s16
      $region20: #{_bi_cls_auc_impl.1} parent=15 // pred_fallthru
        _
      // Predicated region
      $region21: #{_bi_cls_auc_impl.1} parent=15 // pred_check
        %p130 = pneg %p70
      $region22: #{_bi_cls_auc_impl.1} parent=15 // pred_check_branch
        %132 = sbr.rel (%p130) target = $region24
      $region23: #{_bi_cls_auc_impl.1} parent=15 // pred_region
        %s133 = sadd.s32 %s15, %s16
        %p134 = scmp.lt.s32.totalorder %s133, 1
        %s135 = scalar_select %p134, %s133, 1
        %s136 = smul.addr %s135, 8
        %s137 = scalar_lea.vmem %s1, %s136
        %s138 = sadd.s32 %s15, %s16
      $region24: #{_bi_cls_auc_impl.1} parent=15 // pred_fallthru
        _
    $region16: #{_bi_cls_auc_impl.1} parent=5 // pred_fallthru
      _
    %p139 = scmp.le.s32.totalorder 1, %s8
    %p140 = scmp.lt.s32.totalorder %s8, 3
    %p141 = pnand %p139, %p140
    %p142 = pneg %p141
    // Predicated region
    $region25: #{_bi_cls_auc_impl.1} parent=5 // pred_check
      _
    $region26: #{_bi_cls_auc_impl.1} parent=5 // pred_check_branch
      %144 = sbr.rel (%p141) target = $region28
    $region27: #{_bi_cls_auc_impl.1} parent=5 // pred_region
      %s145 = ssub.s32 %s8, 1
      %s146 = sadd.s32 %s17, %s18
      %p147 = scmp.lt.s32.totalorder %s146, 1
      %s148 = scalar_select %p147, %s146, 1
      %s149 = smul.addr %s148, 8
      %s150 = scalar_lea.vmem %s0, %s149
      %p151 = pneg %p48
      %p152 = pneg %p45
      %s153 = sadd.s32 %s17, %s18
      %p154 = scmp.lt.s32.totalorder %s153, 1
      %s155 = scalar_select %p154, %s153, 1
      %s156 = smul.addr %s155, 8
      %s157 = scalar_lea.vmem %s1, %s156
      %p158 = pneg %p76
      %p159 = pneg %p73
      %p160 = pneg %p102
      %p161 = pneg %p99
      %p162 = scmp.lt.s32.totalorder %s17, 1
      %s163 = scalar_select %p162, %s17, 1
      %s164 = smul.addr %s163, 3
      %s165 = smul.addr %s164, 8
      %s166 = scalar_lea.vmem %s2, %s165
      %s167 = sadd.s32 %s17, %s18
      %p168 = scmp.lt.s32.totalorder %s167, 1
      %s169 = scalar_select %p168, %s167, 1
      %s170 = smul.addr %s169, 8
      %s171 = scalar_lea.vmem %s0, %s170
      %s172 = sadd.s32 %s17, %s18
      %s173 = sadd.s32 %s17, %s18
      %p174 = scmp.lt.s32.totalorder %s173, 1
      %s175 = scalar_select %p174, %s173, 1
      %s176 = smul.addr %s175, 8
      %s177 = scalar_lea.vmem %s1, %s176
      %s178 = sadd.s32 %s17, %s18
      %p179 = scmp.lt.s32.totalorder %s17, 1
      %s180 = scalar_select %p179, %s17, 1
      %s181 = smul.addr %s180, 3
      %s182 = smul.addr %s181, 8
      %s183 = scalar_lea.vmem %s2, %s182
      %p184 = scmp.eq.s32.totalorder %s18, 0
      // Predicated region
      $region29: #{_bi_cls_auc_impl.1} parent=27 // pred_check
        %p185 = pneg %p184
      $region30: #{_bi_cls_auc_impl.1} parent=27 // pred_check_branch
        %187 = sbr.rel (%p185) target = $region32
      $region31: #{_bi_cls_auc_impl.1} parent=27 // pred_region
        %188 = vst [vmem:[%s183] sm:$0xff] 0.0
        %s189 = scalar_lea.vmem %s183, 8
        %190 = vst [vmem:[%s189] sm:$0xff] inf
        %s191 = scalar_lea.vmem %s183, 16
        %192 = vst [vmem:[%s191] sm:$0xff] -inf
      $region32: #{_bi_cls_auc_impl.1} parent=27 // pred_fallthru
        _
      %v193 = vld [vmem:[%s171] sm:$0xff]
      %v194 = vld [vmem:[%s177] sm:$0xff]
      %v195 = vmul.f32 %v193, %v194
      %v196 = vld [vmem:[%s183] sm:$0xff]
      %v197 = vadd.f32 %v195, 0.0
      %v198 = vadd.f32 %v196, %v197
      %199 = vst [vmem:[%s183] sm:$0xff] %v198
      %s200 = scalar_lea.vmem %s183, 8
      %v201 = vld [vmem:[%s200] sm:$0xff]
      %v202 = vmin.f32 %v201, %v193
      %203 = vst [vmem:[%s200] sm:$0xff] %v202
      %s204 = scalar_lea.vmem %s183, 16
      %v205 = vld [vmem:[%s204] sm:$0xff]
      %v206 = vmax.f32 %v205, %v193
      %207 = vst [vmem:[%s204] sm:$0xff] %v206
      %p208 = scmp.lt.s32.totalorder %s17, 1
      %s209 = scalar_select %p208, %s17, 1
      %s210 = smul.addr %s209, 3
      %s211 = smul.addr %s210, 8
      %s212 = scalar_lea.vmem %s2, %s211
      // Predicated region
      $region33: #{_bi_cls_auc_impl.1} parent=27 // pred_check
        %p213 = pneg %p99
      $region34: #{_bi_cls_auc_impl.1} parent=27 // pred_check_branch
        %215 = sbr.rel (%p213) target = $region36
      $region35: #{_bi_cls_auc_impl.1} parent=27 // pred_region
        _
      $region36: #{_bi_cls_auc_impl.1} parent=27 // pred_fallthru
        _
    $region28: #{_bi_cls_auc_impl.1} parent=5 // pred_fallthru
      _
    %p216 = scmp.le.s32.totalorder 2, %s8
    // Predicated region
    $region37: #{_bi_cls_auc_impl.1} parent=5 // pred_check
      %p217 = pneg %p216
    $region38: #{_bi_cls_auc_impl.1} parent=5 // pred_check_branch
      %219 = sbr.rel (%p217) target = $region40
    $region39: #{_bi_cls_auc_impl.1} parent=5 // pred_region
      %s220 = ssub.s32 %s8, 2
      // Predicated region
      $region41: #{_bi_cls_auc_impl.1} parent=39 // pred_check
        %p221 = pneg %p105
      $region42: #{_bi_cls_auc_impl.1} parent=39 // pred_check_branch
        %223 = sbr.rel (%p221) target = $region44
      $region43: #{_bi_cls_auc_impl.1} parent=39 // pred_region
        %p224 = scmp.lt.s32.totalorder %s19, 1
        %s225 = scalar_select %p224, %s19, 1
        %s226 = smul.addr %s225, 3
        %s227 = smul.addr %s226, 8
        %s228 = scalar_lea.vmem %s2, %s227
      $region44: #{_bi_cls_auc_impl.1} parent=39 // pred_fallthru
        _
    $region40: #{_bi_cls_auc_impl.1} parent=5 // pred_fallthru
      _
  $region6: #{_bi_cls_auc_impl.1} parent=0 // loop_footer
    %s12 = sadd.s32 1, %s8
  $region7: #{_bi_cls_auc_impl.1} parent=0 // loop_footer_branch
    %7 = sbr.rel target = $region3
  $region8: #{_bi_cls_auc_impl.1} parent=0 // loop_exit
    _

</llo_original>
